<compile_context>
chip_gen: v6e
topology: v6e:2x2x1
jax: 0.10.0
libtpu: 0.0.40
codegen_flags: <defaults>
</compile_context>

<pallas_src>
import math

import jax
import jax.numpy as jnp
from jax.experimental import pallas as pl
from jax.experimental.pallas import tpu as pltpu


# ------------------------------- kernels -----------------------------------


def _layer1_kernel(xT_ref, adjT_ref, w1t_ref, b1t_ref, w2t_ref, zT_ref):
    """z^T[:, tile] = W2^T @ relu(W1^T @ (x^T @ An^T[:, tile]) + b1^T)."""
    aggT = jnp.dot(xT_ref[...], adjT_ref[...],
                   preferred_element_type=jnp.float32)            # (F, tm)
    h1T = jnp.dot(w1t_ref[...], aggT,
                  preferred_element_type=jnp.float32)             # (H, tm)
    h1T = jnp.maximum(h1T + b1t_ref[...], 0.0)                    # bias + relu
    zT_ref[...] = jnp.dot(w2t_ref[...], h1T,
                          preferred_element_type=jnp.float32)     # (F, tm)


def _layer2_kernel(zT_ref, adjT_ref, b2t_ref, outT_ref):
    """out^T[:, tile] = sigmoid(z^T @ An^T[:, tile] + b2^T)."""
    aggT = jnp.dot(zT_ref[...], adjT_ref[...],
                   preferred_element_type=jnp.float32)            # (F, tm)
    outT_ref[...] = jax.nn.sigmoid(aggT + b2t_ref[...])


# ------------------------------ tiling helpers -------------------------------


def _vmem_capacity_bytes():
    try:
        info = pltpu.get_tpu_info()
        cap = getattr(info, "vmem_capacity_bytes", None)
        if cap:
            return int(cap)
    except Exception:
        pass
    return 64 << 20  # conservative fallback (v7x per-core VMEM)


def _pick_col_tile(n_p, stream_itemsize, resident_bytes, vmem_ceiling):
    """Largest node-axis tile that keeps >=2 grid steps and fits VMEM."""
    headroom = 2 << 20
    for tm in (512, 256, 128):
        if n_p % tm:
            continue
        if n_p // tm < 2 and n_p > 128:
            continue  # keep >=2 grid steps for v7x's two TCs / DMA pipelining
        if 2 * n_p * tm * stream_itemsize + resident_bytes + headroom <= vmem_ceiling:
            return tm
    # TODO(synk): for very large N, add a contraction-axis ("arbitrary") grid
    # dim with an f32 accumulator instead of streaming full (N, tm) stripes.
    return 128


def _vmem_budget(n_p, tm, stream_itemsize, resident_bytes, vmem_ceiling):
    need = 2 * n_p * tm * stream_itemsize + resident_bytes + (2 << 20)
    return int(min(max(need, 16 << 20), vmem_ceiling))


# ------------------------------- wrapper ------------------------------------


def ginn_autoencoder_forward(features, mask, adj_norm, w1, b1, w2, b2):
    n, f = features.shape
    h = w1.shape[1]
    f32 = jnp.float32

    # Hoisted out of the kernels: masking, transposes, quantization of the
    # large streamed operand (normalized adjacency) to bf16.
    xT = (features * mask).T.astype(jnp.bfloat16)        # (F, N)  lane = node
    adjT = adj_norm.T.astype(jnp.bfloat16)               # (N, N)
    w1t = w1.T.astype(f32)                               # (H, F)
    b1t = b1.reshape(h, 1).astype(f32)                   # (H, 1)
    w2t = w2.T.astype(f32)                               # (F, H)
    b2t = b2.reshape(f, 1).astype(f32)                   # (F, 1)

    # Pad node axis to a multiple of 128 (zero rows/cols; padded outputs are
    # sliced off) so ragged N never forces a single full-(N,N) VMEM block.
    pad = (-n) % 128
    n_p = n + pad
    if pad:
        xT = jnp.pad(xT, ((0, 0), (0, pad)))
        adjT = jnp.pad(adjT, ((0, pad), (0, pad)))

    cap = _vmem_capacity_bytes()
    ceiling = max(16 << 20, (cap * 3) // 4)   # ~48 MiB v7x, ~96 MiB v5e/v6e
    bf = 2                                     # bf16 itemsize (streamed adjT)
    resident = bf * f * n_p + 4 * (h * f + h + f * h + f) + 4 * 2 * f * 512
    tm = _pick_col_tile(n_p, bf, resident, ceiling)
    grid = (n_p // tm,)
    cparams = pltpu.CompilerParams(
        dimension_semantics=("parallel",),
        vmem_limit_bytes=_vmem_budget(n_p, tm, bf, resident, ceiling),
    )

    # ---- layer 1 (+ pre-applied W2): z^T = W2^T @ relu(W1^T @ (x^T @ An^T) + b1^T)
    zT = pl.pallas_call(
        _layer1_kernel,
        out_shape=jax.ShapeDtypeStruct((f, n_p), f32),
        grid=grid,
        in_specs=[
            pl.BlockSpec((f, n_p), lambda i: (0, 0)),    # x^T   (resident, bf16)
            pl.BlockSpec((n_p, tm), lambda i: (0, i)),   # An^T  column stripe (bf16)
            pl.BlockSpec((h, f), lambda i: (0, 0)),      # W1^T
            pl.BlockSpec((h, 1), lambda i: (0, 0)),      # b1^T
            pl.BlockSpec((f, h), lambda i: (0, 0)),      # W2^T
        ],
        out_specs=pl.BlockSpec((f, tm), lambda i: (0, i)),
        compiler_params=cparams,
        cost_estimate=pl.CostEstimate(
            flops=2 * n_p * f * (n_p + 2 * h),
            transcendentals=0,
            bytes_accessed=bf * (n_p * n_p + f * n_p)
            + 4 * (2 * f * h + h + f * n_p),
        ),
    )(xT, adjT, w1t, b1t, w2t)

    # ---- layer 2: out^T = sigmoid(z^T @ An^T + b2^T)
    zT_bf = zT.astype(jnp.bfloat16)
    outT = pl.pallas_call(
        _layer2_kernel,
        out_shape=jax.ShapeDtypeStruct((f, n_p), f32),
        grid=grid,
        in_specs=[
            pl.BlockSpec((f, n_p), lambda i: (0, 0)),    # z^T   (resident, bf16)
            pl.BlockSpec((n_p, tm), lambda i: (0, i)),   # An^T  column stripe (bf16)
            pl.BlockSpec((f, 1), lambda i: (0, 0)),      # b2^T
        ],
        out_specs=pl.BlockSpec((f, tm), lambda i: (0, i)),
        compiler_params=cparams,
        cost_estimate=pl.CostEstimate(
            flops=2 * n_p * n_p * f,
            transcendentals=n_p * f,
            bytes_accessed=bf * (n_p * n_p + f * n_p) + 4 * (f + f * n_p),
        ),
    )(zT_bf, adjT, b2t)

    return outT[:, :n].T   # back to (N, F)


# --------------------------- params / graph / ref ---------------------------


def _uniform_param(key, shape, stdv):
    # Mirrors nn.Parameter(...).data.uniform_(-stdv, stdv)
    return jax.random.uniform(key, shape, dtype=jnp.float32,
                              minval=-stdv, maxval=stdv)


def build_params(key, in_feats, h_feats):
    k1, k2, k3, k4 = jax.random.split(key, 4)
    stdv1 = 1.0 / math.sqrt(h_feats)   # GCL1: weight (in_feats, h_feats)
    stdv2 = 1.0 / math.sqrt(in_feats)  # GCL2: weight (h_feats, in_feats)
    w1 = _uniform_param(k1, (in_feats, h_feats), stdv1)
    b1 = _uniform_param(k2, (1, h_feats), stdv1)
    w2 = _uniform_param(k3, (h_feats, in_feats), stdv2)
    b2 = _uniform_param(k4, (1, in_feats), stdv2)
    return w1, b1, w2, b2


def build_graph(n):
    # Deterministic ring graph with self-loops (dense adjacency) and the
    # standard GCN normalization norm = 1/sqrt(degree), stored as (N, 1).
    idx = jnp.arange(n)
    adj = jnp.zeros((n, n), dtype=jnp.float32)
    adj = adj.at[idx, idx].set(1.0)
    adj = adj.at[idx, (idx + 1) % n].set(1.0)
    adj = adj.at[idx, (idx - 1) % n].set(1.0)
    deg = jnp.sum(adj, axis=1, keepdims=True)
    norm = 1.0 / jnp.sqrt(deg)
    # Static graph: fold both per-layer norm scalings into the adjacency once.
    # TODO(synk): for genuinely large sparse graphs, replace the dense (N,N)
    # aggregation with a scalar-prefetched neighbor-gather (CSR offsets in
    # SMEM driving the index_map / manual DMA) instead of a dense matmul.
    adj_norm = norm * adj * norm.T
    return adj, norm, adj_norm


def reference_forward(features, mask, adj, norm, w1, b1, w2, b2):
    # Pure-JAX reference in the ORIGINAL op order (validates the algebraic
    # rewrites used by the kernels).  Full f32 matmul precision.
    hp = jax.lax.Precision.HIGHEST
    x = features * mask
    h = jnp.dot(x, w1, precision=hp) * norm
    h = jnp.dot(adj, h, precision=hp) * norm + b1
    h = jnp.maximum(h, 0.0)
    h = jnp.dot(h, w2, precision=hp) * norm
    h = jnp.dot(adj, h, precision=hp) * norm + b2
    return jax.nn.sigmoid(h)


if __name__ == "__main__":
    # Small demo shapes: N=256 graph nodes (-> 2 parallel node tiles of 128),
    # in_feats=8, h_feats=32.
    N, IN_FEATS, H_FEATS = 256, 8, 32

    key = jax.random.PRNGKey(0)
    k_feat, k_mask, k_params = jax.random.split(key, 3)

    features = jax.random.normal(k_feat, (N, IN_FEATS), dtype=jnp.float32)
    # Binary observation mask, as in GINN (missing entries -> 0).
    mask = (jax.random.uniform(k_mask, (N, IN_FEATS)) > 0.3).astype(jnp.float32)

    adj, norm, adj_norm = build_graph(N)
    w1, b1, w2, b2 = build_params(k_params, IN_FEATS, H_FEATS)

    # TODO(synk): dropout is a no-op here (eval mode / dropout=0); stateful
    # training-time dropout is not part of this forward kernel.

    out = ginn_autoencoder_forward(features, mask, adj_norm, w1, b1, w2, b2)
    out = jax.block_until_ready(out)

    ref = reference_forward(features, mask, adj, norm, w1, b1, w2, b2)
    assert out.shape == (N, IN_FEATS)
    # bf16 quantization of the streamed adjacency / node features in the
    # kernel path -> tolerance loosened vs. the pure-f32 reference.
    assert jnp.allclose(out, ref, atol=3e-2, rtol=3e-2), "mismatch vs reference"

    print("KERNEL_OK")
</pallas_src>

<mosaic_0001>
module attributes {stable_mosaic.version = 11 : i64} {
  func.func @_layer1_kernel(%arg0: i32, %arg1: memref<8x256xbf16, #tpu.memory_space<vmem>>, %arg2: memref<256x128xbf16, #tpu.memory_space<vmem>>, %arg3: memref<32x8xf32, #tpu.memory_space<vmem>>, %arg4: memref<32x1xf32, #tpu.memory_space<vmem>>, %arg5: memref<8x32xf32, #tpu.memory_space<vmem>>, %arg6: memref<8x128xf32, #tpu.memory_space<vmem>>) attributes {dimension_semantics = [#tpu.dimension_semantics<parallel>], iteration_bounds = array<i64: 2>, scalar_prefetch = 0 : i64, scratch_operands = 0 : i64, tpu.core_type = #tpu.core_type<tc>, window_params = [{pipeline_mode = #tpu.pipeline_mode<synchronous>, transform_indices = @transform_0, window_bounds = array<i64: 8, 256>}, {transform_indices = @transform_1, window_bounds = array<i64: 256, 128>}, {pipeline_mode = #tpu.pipeline_mode<synchronous>, transform_indices = @transform_2, window_bounds = array<i64: 32, 8>}, {pipeline_mode = #tpu.pipeline_mode<synchronous>, transform_indices = @transform_3, window_bounds = array<i64: 32, 1>}, {pipeline_mode = #tpu.pipeline_mode<synchronous>, transform_indices = @transform_4, window_bounds = array<i64: 8, 32>}, {transform_indices = @transform_5, window_bounds = array<i64: 8, 128>}]} {
    %c0 = arith.constant 0 : index
    %c0_0 = arith.constant 0 : index
    %0 = vector.load %arg1[%c0, %c0_0] : memref<8x256xbf16, #tpu.memory_space<vmem>>, vector<8x256xbf16>
    %c0_1 = arith.constant 0 : index
    %c0_2 = arith.constant 0 : index
    %1 = vector.load %arg2[%c0_1, %c0_2] : memref<256x128xbf16, #tpu.memory_space<vmem>>, vector<256x128xbf16>
    %cst = arith.constant dense<0.000000e+00> : vector<8x128xf32>
    %2 = tpu.matmul %0, %1, %cst {dimension_numbers = #tpu.dot_dimension_numbers<[1], [0], [0], [1], [0, 0, 1, 1], [], []>} : vector<8x256xbf16>, vector<256x128xbf16>, vector<8x128xf32> -> vector<8x128xf32>
    %c0_3 = arith.constant 0 : index
    %c0_4 = arith.constant 0 : index
    %3 = vector.load %arg3[%c0_3, %c0_4] : memref<32x8xf32, #tpu.memory_space<vmem>>, vector<32x8xf32>
    %cst_5 = arith.constant dense<0.000000e+00> : vector<32x128xf32>
    %4 = tpu.matmul %3, %2, %cst_5 {dimension_numbers = #tpu.dot_dimension_numbers<[1], [0], [0], [1], [0, 0, 1, 1], [], []>} : vector<32x8xf32>, vector<8x128xf32>, vector<32x128xf32> -> vector<32x128xf32>
    %c0_6 = arith.constant 0 : index
    %c0_7 = arith.constant 0 : index
    %5 = vector.load %arg4[%c0_6, %c0_7] : memref<32x1xf32, #tpu.memory_space<vmem>>, vector<32x1xf32>
    %6 = vector.broadcast %5 : vector<32x1xf32> to vector<32x128xf32>
    %7 = arith.addf %4, %6 : vector<32x128xf32>
    %cst_8 = arith.constant 0.000000e+00 : f32
    %8 = vector.broadcast %cst_8 : f32 to vector<32x128xf32>
    %9 = arith.maximumf %7, %8 : vector<32x128xf32>
    %c0_9 = arith.constant 0 : index
    %c0_10 = arith.constant 0 : index
    %10 = vector.load %arg5[%c0_9, %c0_10] : memref<8x32xf32, #tpu.memory_space<vmem>>, vector<8x32xf32>
    %cst_11 = arith.constant dense<0.000000e+00> : vector<8x128xf32>
    %11 = tpu.matmul %10, %9, %cst_11 {dimension_numbers = #tpu.dot_dimension_numbers<[1], [0], [0], [1], [0, 0, 1, 1], [], []>} : vector<8x32xf32>, vector<32x128xf32>, vector<8x128xf32> -> vector<8x128xf32>
    %c0_12 = arith.constant 0 : index
    %c0_13 = arith.constant 0 : index
    %12 = vector.load %arg6[%c0_12, %c0_13] : memref<8x128xf32, #tpu.memory_space<vmem>>, vector<8x128xf32>
    tpu.vector_store %arg6[%c0_12, %c0_13], %11 {strides = array<i32>} : memref<8x128xf32, #tpu.memory_space<vmem>>, vector<8x128xf32>,
    return
  }
  func.func @transform_0(%arg0: i32) -> (i32, i32) {
    %c0_i32 = arith.constant 0 : i32
    %c0_i32_0 = arith.constant 0 : i32
    %c0_i32_1 = arith.constant 0 : i32
    return %c0_i32, %c0_i32_0 : i32, i32
  }
  func.func @transform_1(%arg0: i32) -> (i32, i32) {
    %c0_i32 = arith.constant 0 : i32
    %c0_i32_0 = arith.constant 0 : i32
    return %c0_i32, %arg0 : i32, i32
  }
  func.func @transform_2(%arg0: i32) -> (i32, i32) {
    %c0_i32 = arith.constant 0 : i32
    %c0_i32_0 = arith.constant 0 : i32
    %c0_i32_1 = arith.constant 0 : i32
    return %c0_i32, %c0_i32_0 : i32, i32
  }
  func.func @transform_3(%arg0: i32) -> (i32, i32) {
    %c0_i32 = arith.constant 0 : i32
    %c0_i32_0 = arith.constant 0 : i32
    %c0_i32_1 = arith.constant 0 : i32
    return %c0_i32, %c0_i32_0 : i32, i32
  }
  func.func @transform_4(%arg0: i32) -> (i32, i32) {
    %c0_i32 = arith.constant 0 : i32
    %c0_i32_0 = arith.constant 0 : i32
    %c0_i32_1 = arith.constant 0 : i32
    return %c0_i32, %c0_i32_0 : i32, i32
  }
  func.func @transform_5(%arg0: i32) -> (i32, i32) {
    %c0_i32 = arith.constant 0 : i32
    %c0_i32_0 = arith.constant 0 : i32
    return %c0_i32, %arg0 : i32, i32
  }
}

</mosaic_0001>

<llo_original>
// kernel: tpu_custom_call.1
$region0: #{tpu_custom_call.1}
  #allocation0 [shape = 'u32[]', space=smem, size = 0x4, offset = 0x4, fixed_abs, tag = 'smem constant byte address 0x4 - core index']
  #allocation1 [shape = 'u32[144,128]{1,0:T(1,128)}', space=vmem, size = 0x12000, scoped, tag = 'internal scratch']
  %s0 = inlined_call_operand.vmem [shape: bf16[8,256], index: 0, kind: input, shape index: {}]
  %s1 = inlined_call_operand.hbm [shape: bf16[256,256], index: 1, kind: input, shape index: {}]
  %s2 = inlined_call_operand.vmem [shape: f32[32,8], index: 2, kind: input, shape index: {}]
  %s3 = inlined_call_operand.vmem [shape: f32[32,1], index: 3, kind: input, shape index: {}]
  %s4 = inlined_call_operand.vmem [shape: f32[8,32], index: 4, kind: input, shape index: {}]
  %s5 = inlined_call_operand.hbm [shape: f32[8,256], index: 5, kind: output, shape index: {}]
  %s6 = sld [smem:[#allocation0]]
  $region57: #{tpu_custom_call.1} parent=0
    _
  %s8 = ssub.s32 1, %s6
  %s9 = scalar_select 0, %s8, %s6
  $region1: #{tpu_custom_call.1} parent=0
    #allocation2 [shape = 'u8[131072]{0}', space=vmem, size = 0x20000, scoped, tag = 'input window, operand 1']
    #allocation3 [shape = 's32[2]{0}', space=sflag, size = 0x8, scoped, tag = 'scoped memory for tpu_custom_call.1']
    #allocation4 [shape = 's32[2]{0}', space=sflag, size = 0x8, scoped, tag = 'scoped memory for tpu_custom_call.1']
    #allocation5 [shape = 'u8[8192]{0}', space=vmem, size = 0x2000, scoped, tag = 'output window, operand 0']
    %10 = vsyncpa [#allocation3], 0
    %s11 = scalar_lea.sflag [#allocation3], 1
    %12 = vsyncpa %s11, 0
    %13 = vsyncpa [#allocation4], 0
    %s14 = scalar_lea.sflag [#allocation4], 1
    %15 = vsyncpa %s14, 0
    loop: start=0, step=1, limit=4
    $region2: #{tpu_custom_call.1} parent=1 // loop_pre_header
      _
    $region3: #{tpu_custom_call.1} parent=1 // loop_header
      %s17 = sphi 0, %s21
      %p18 = scmp.ge.s32.totalorder %s17, 4
      %s25 = sphi 0, %s25
      %s27 = sphi 0, %s25
      %s28 = sphi 0, %s27
      %s42 = sphi 0, %s28
      %s48 = sphi 0, %s50
      %s51 = sphi 0, %s48
      %s52 = sphi 0, %s51
      %s68 = sphi 0, %s52
      %s72 = sphi 0, %s72
      %s74 = sphi 0, %s72
      %s75 = sphi 0, %s74
      %s89 = sphi 0, %s75
      %s93 = sphi 0, %s93
      %s95 = sphi 0, %s93
      %s96 = sphi 0, %s95
      %s110 = sphi 0, %s96
      %s114 = sphi 0, %s114
      %s116 = sphi 0, %s114
      %s117 = sphi 0, %s116
      %s131 = sphi 0, %s117
      %s137 = sphi 0, %s139
      %s140 = sphi 0, %s137
      %s141 = sphi 0, %s140
      %s157 = sphi 0, %s141
    $region4: #{tpu_custom_call.1} parent=1 // loop_header_branch
      %20 = sbr.rel (%p18) target = $region8
    $region5: #{tpu_custom_call.1} parent=1 // loop_body
      %s22 = ssub.s32 %s17, 1
      %s23 = ssub.s32 %s17, 2
      %s24 = sadd.s32 %s17, 1
      %s26 = sadd.s32 %s25, 1
      %p29 = scmp.eq.s32.totalorder %s17, 1
      %p30 = scmp.ne.s32.totalorder %s25, %s27
      %p31 = scmp.eq.s32.totalorder %s17, 0
      %p32 = por %p30, %p31
      %p33 = scmp.ne.s32.totalorder %s25, %s27
      %p34 = scmp.eq.s32.totalorder %s22, 1
      %p35 = por %p33, %p34
      %p36 = scmp.ne.s32.totalorder %s27, %s28
      %p37 = scmp.eq.s32.totalorder %s22, 0
      %p38 = por %p36, %p37
      %p39 = scmp.ne.s32.totalorder %s27, %s28
      %p40 = scmp.eq.s32.totalorder %s23, 1
      %p41 = por %p39, %p40
      %p43 = scmp.ne.s32.totalorder %s28, %s42
      %p44 = scmp.eq.s32.totalorder %s23, 0
      %p45 = por %p43, %p44
      %s46 = ssub.s32 %s17, %s24
      %p47 = scmp.eq.s32.totalorder %s46, 0
      %s49 = sadd.s32 %s48, 1
      %s50 = scalar_select %p47, %s48, %s49
      %p53 = pneg %p47
      %p54 = scmp.eq.s32.totalorder %s17, 1
      %p55 = por %p53, %p54
      %p56 = scmp.ne.s32.totalorder %s48, %s51
      %p57 = scmp.eq.s32.totalorder %s17, 0
      %p58 = por %p56, %p57
      %p59 = scmp.ne.s32.totalorder %s48, %s51
      %p60 = scmp.eq.s32.totalorder %s22, 1
      %p61 = por %p59, %p60
      %p62 = scmp.ne.s32.totalorder %s51, %s52
      %p63 = scmp.eq.s32.totalorder %s22, 0
      %p64 = por %p62, %p63
      %p65 = scmp.ne.s32.totalorder %s51, %s52
      %p66 = scmp.eq.s32.totalorder %s23, 1
      %p67 = por %p65, %p66
      %p69 = scmp.ne.s32.totalorder %s52, %s68
      %p70 = scmp.eq.s32.totalorder %s23, 0
      %p71 = por %p69, %p70
      %s73 = sadd.s32 %s72, 1
      %p76 = scmp.eq.s32.totalorder %s17, 1
      %p77 = scmp.ne.s32.totalorder %s72, %s74
      %p78 = scmp.eq.s32.totalorder %s17, 0
      %p79 = por %p77, %p78
      %p80 = scmp.ne.s32.totalorder %s72, %s74
      %p81 = scmp.eq.s32.totalorder %s22, 1
      %p82 = por %p80, %p81
      %p83 = scmp.ne.s32.totalorder %s74, %s75
      %p84 = scmp.eq.s32.totalorder %s22, 0
      %p85 = por %p83, %p84
      %p86 = scmp.ne.s32.totalorder %s74, %s75
      %p87 = scmp.eq.s32.totalorder %s23, 1
      %p88 = por %p86, %p87
      %p90 = scmp.ne.s32.totalorder %s75, %s89
      %p91 = scmp.eq.s32.totalorder %s23, 0
      %p92 = por %p90, %p91
      %s94 = sadd.s32 %s93, 1
      %p97 = scmp.eq.s32.totalorder %s17, 1
      %p98 = scmp.ne.s32.totalorder %s93, %s95
      %p99 = scmp.eq.s32.totalorder %s17, 0
      %p100 = por %p98, %p99
      %p101 = scmp.ne.s32.totalorder %s93, %s95
      %p102 = scmp.eq.s32.totalorder %s22, 1
      %p103 = por %p101, %p102
      %p104 = scmp.ne.s32.totalorder %s95, %s96
      %p105 = scmp.eq.s32.totalorder %s22, 0
      %p106 = por %p104, %p105
      %p107 = scmp.ne.s32.totalorder %s95, %s96
      %p108 = scmp.eq.s32.totalorder %s23, 1
      %p109 = por %p107, %p108
      %p111 = scmp.ne.s32.totalorder %s96, %s110
      %p112 = scmp.eq.s32.totalorder %s23, 0
      %p113 = por %p111, %p112
      %s115 = sadd.s32 %s114, 1
      %p118 = scmp.eq.s32.totalorder %s17, 1
      %p119 = scmp.ne.s32.totalorder %s114, %s116
      %p120 = scmp.eq.s32.totalorder %s17, 0
      %p121 = por %p119, %p120
      %p122 = scmp.ne.s32.totalorder %s114, %s116
      %p123 = scmp.eq.s32.totalorder %s22, 1
      %p124 = por %p122, %p123
      %p125 = scmp.ne.s32.totalorder %s116, %s117
      %p126 = scmp.eq.s32.totalorder %s22, 0
      %p127 = por %p125, %p126
      %p128 = scmp.ne.s32.totalorder %s116, %s117
      %p129 = scmp.eq.s32.totalorder %s23, 1
      %p130 = por %p128, %p129
      %p132 = scmp.ne.s32.totalorder %s117, %s131
      %p133 = scmp.eq.s32.totalorder %s23, 0
      %p134 = por %p132, %p133
      %s135 = ssub.s32 %s17, %s24
      %p136 = scmp.eq.s32.totalorder %s135, 0
      %s138 = sadd.s32 %s137, 1
      %s139 = scalar_select %p136, %s137, %s138
      %p142 = pneg %p136
      %p143 = scmp.eq.s32.totalorder %s17, 1
      %p144 = por %p142, %p143
      %p145 = scmp.ne.s32.totalorder %s137, %s140
      %p146 = scmp.eq.s32.totalorder %s17, 0
      %p147 = por %p145, %p146
      %p148 = scmp.ne.s32.totalorder %s137, %s140
      %p149 = scmp.eq.s32.totalorder %s22, 1
      %p150 = por %p148, %p149
      %p151 = scmp.ne.s32.totalorder %s140, %s141
      %p152 = scmp.eq.s32.totalorder %s22, 0
      %p153 = por %p151, %p152
      %p154 = scmp.ne.s32.totalorder %s140, %s141
      %p155 = scmp.eq.s32.totalorder %s23, 1
      %p156 = por %p154, %p155
      %p158 = scmp.ne.s32.totalorder %s141, %s157
      %p159 = scmp.eq.s32.totalorder %s23, 0
      %p160 = por %p158, %p159
      %p161 = scmp.le.s32.totalorder 1, %s17
      %p162 = scmp.lt.s32.totalorder %s17, 3
      %p163 = pnand %p161, %p162
      %p164 = pneg %p163
      // Predicated region
      $region9: #{tpu_custom_call.1} parent=5 // pred_check
        _
      $region10: #{tpu_custom_call.1} parent=5 // pred_check_branch
        %166 = sbr.rel (%p163) target = $region12
      $region11: #{tpu_custom_call.1} parent=5 // pred_region
        %s167 = ssub.s32 %s17, 1
        // Predicated region
        $region13: #{tpu_custom_call.1} parent=11 // pred_check
          %p168 = pneg %p38
        $region14: #{tpu_custom_call.1} parent=11 // pred_check_branch
          %170 = sbr.rel (%p168) target = $region16
        $region15: #{tpu_custom_call.1} parent=11 // pred_region
          _
        $region16: #{tpu_custom_call.1} parent=11 // pred_fallthru
          _
        // Predicated region
        $region17: #{tpu_custom_call.1} parent=11 // pred_check
          %p171 = pneg %p85
        $region18: #{tpu_custom_call.1} parent=11 // pred_check_branch
          %173 = sbr.rel (%p171) target = $region20
        $region19: #{tpu_custom_call.1} parent=11 // pred_region
          _
        $region20: #{tpu_custom_call.1} parent=11 // pred_fallthru
          _
        // Predicated region
        $region21: #{tpu_custom_call.1} parent=11 // pred_check
          %p174 = pneg %p106
        $region22: #{tpu_custom_call.1} parent=11 // pred_check_branch
          %176 = sbr.rel (%p174) target = $region24
        $region23: #{tpu_custom_call.1} parent=11 // pred_region
          _
        $region24: #{tpu_custom_call.1} parent=11 // pred_fallthru
          _
        // Predicated region
        $region25: #{tpu_custom_call.1} parent=11 // pred_check
          %p177 = pneg %p127
        $region26: #{tpu_custom_call.1} parent=11 // pred_check_branch
          %179 = sbr.rel (%p177) target = $region28
        $region27: #{tpu_custom_call.1} parent=11 // pred_region
          _
        $region28: #{tpu_custom_call.1} parent=11 // pred_fallthru
          _
      $region12: #{tpu_custom_call.1} parent=5 // pred_fallthru
        _
      %p180 = scmp.lt.s32.totalorder %s17, 2
      // Predicated region
      $region29: #{tpu_custom_call.1} parent=5 // pred_check
        %p181 = pneg %p180
      $region30: #{tpu_custom_call.1} parent=5 // pred_check_branch
        %183 = sbr.rel (%p181) target = $region32
      $region31: #{tpu_custom_call.1} parent=5 // pred_region
        // Predicated region
        $region33: #{tpu_custom_call.1} parent=31 // pred_check
          %p184 = pneg %p58
        $region34: #{tpu_custom_call.1} parent=31 // pred_check_branch
          %186 = sbr.rel (%p184) target = $region36
        $region35: #{tpu_custom_call.1} parent=31 // pred_region
          %s187 = sand.u32 %s48, 1
          %s188 = scalar_lea.sflag [#allocation3], %s187
          %s189 = sand.u32 %s48, 1
          %s190 = smul.addr %s189, 128
          %s191 = scalar_lea.vmem [#allocation2], %s190
          %s193 = ssub.s32 2048, 2048
          %194 = vsyncadd %s188, %s193
          %s195 = smul.addr %s17, 64
          %s196 = scalar_lea.hbm %s1, %s195
          %s197 = sshll.u32 %s191, 4
          %s198 = int_to_ptr.vmem [resolvable:$true] %s197
          %203 = dma.hbm_to_vmem [thread:$0]  %s196, 2048, %s198, %s188, 128, 64, 4
        $region36: #{tpu_custom_call.1} parent=31 // pred_fallthru
          _
      $region32: #{tpu_custom_call.1} parent=5 // pred_fallthru
        _
      %p204 = scmp.le.s32.totalorder 1, %s17
      %p205 = scmp.lt.s32.totalorder %s17, 3
      %p206 = pnand %p204, %p205
      %p207 = pneg %p206
      // Predicated region
      $region37: #{tpu_custom_call.1} parent=5 // pred_check
        _
      $region38: #{tpu_custom_call.1} parent=5 // pred_check_branch
        %209 = sbr.rel (%p206) target = $region40
      $region39: #{tpu_custom_call.1} parent=5 // pred_region
        %s210 = ssub.s32 %s17, 1
        %s211 = sand.u32 %s51, 1
        %s212 = scalar_lea.sflag [#allocation3], %s211
        %s213 = sand.u32 %s51, 1
        %s214 = smul.addr %s213, 128
        %s215 = scalar_lea.vmem [#allocation2], %s214
        // Predicated region
        $region41: #{tpu_custom_call.1} parent=39 // pred_check
          %p216 = pneg %p64
        $region42: #{tpu_custom_call.1} parent=39 // pred_check_branch
          %218 = sbr.rel (%p216) target = $region44
        $region43: #{tpu_custom_call.1} parent=39 // pred_region
          %219 = dma.done %s212, 2048
        $region44: #{tpu_custom_call.1} parent=39 // pred_fallthru
          _
        %p220 = pneg %p38
        %p221 = pneg %p35
        %s222 = sand.u32 %s51, 1
        %s223 = scalar_lea.sflag [#allocation3], %s222
        %s224 = sand.u32 %s51, 1
        %s225 = smul.addr %s224, 128
        %s226 = scalar_lea.vmem [#allocation2], %s225
        %p227 = pneg %p64
        %p228 = pneg %p61
        %p229 = pneg %p85
        %p230 = pneg %p82
        %p231 = pneg %p106
        %p232 = pneg %p103
        %p233 = pneg %p127
        %p234 = pneg %p124
        %p235 = pneg %p153
        %p236 = pneg %p150
        %s237 = sand.u32 %s140, 1
        %s238 = scalar_lea.sflag [#allocation4], %s237
        %s239 = sand.u32 %s140, 1
        %s240 = smul.addr %s239, 8
        %s241 = scalar_lea.vmem [#allocation5], %s240
        %v243 = vld [vmem:[%s0] sm:$0xff]
        %v244 = vld [vmem:[%s215] sm:$0xf]
        %v245 = vld [vmem:[%s215 + $0x4] sm:$0xf]
        %v246 = vld [vmem:[%s215 + $0x8] sm:$0xf]
        %v247 = vld [vmem:[%s215 + $0xc] sm:$0xf]
        %v248 = vld [vmem:[%s215 + $0x10] sm:$0xf]
        %v249 = vld [vmem:[%s215 + $0x14] sm:$0xf]
        %v250 = vld [vmem:[%s215 + $0x18] sm:$0xf]
        %v251 = vld [vmem:[%s215 + $0x1c] sm:$0xf]
        %v252 = vld [vmem:[%s215 + $0x20] sm:$0xf]
        %v253 = vld [vmem:[%s215 + $0x24] sm:$0xf]
        %v254 = vld [vmem:[%s215 + $0x28] sm:$0xf]
        %v255 = vld [vmem:[%s215 + $0x2c] sm:$0xf]
        %v256 = vld [vmem:[%s215 + $0x30] sm:$0xf]
        %v257 = vld [vmem:[%s215 + $0x34] sm:$0xf]
        %v258 = vld [vmem:[%s215 + $0x38] sm:$0xf]
        %v259 = vld [vmem:[%s215 + $0x3c] sm:$0xf]
        %v260 = vld [vmem:[%s215 + $0x40] sm:$0xf]
        %v261 = vld [vmem:[%s215 + $0x44] sm:$0xf]
        %v262 = vld [vmem:[%s215 + $0x48] sm:$0xf]
        %v263 = vld [vmem:[%s215 + $0x4c] sm:$0xf]
        %v264 = vld [vmem:[%s215 + $0x50] sm:$0xf]
        %v265 = vld [vmem:[%s215 + $0x54] sm:$0xf]
        %v266 = vld [vmem:[%s215 + $0x58] sm:$0xf]
        %v267 = vld [vmem:[%s215 + $0x5c] sm:$0xf]
        %v268 = vld [vmem:[%s215 + $0x60] sm:$0xf]
        %v269 = vld [vmem:[%s215 + $0x64] sm:$0xf]
        %v270 = vld [vmem:[%s215 + $0x68] sm:$0xf]
        %v271 = vld [vmem:[%s215 + $0x6c] sm:$0xf]
        %v272 = vld [vmem:[%s215 + $0x70] sm:$0xf]
        %v273 = vld [vmem:[%s215 + $0x74] sm:$0xf]
        %v274 = vld [vmem:[%s215 + $0x78] sm:$0xf]
        %v275 = vld [vmem:[%s215 + $0x7c] sm:$0xf]
        %v277 = vunpack.c.l.b16 %v243
        %v278 = vunpack.c.h.b16 %v243
        %v279 = vpack.c.b16 %v277, %v277
        %v280 = vpack.c.b16 %v278, %v278
        %v315 = vunpack.c.l.b16 %v244
        %v316 = vunpack.c.l.b16 %v245
        %v317 = vunpack.c.l.b16 %v246
        %v318 = vunpack.c.l.b16 %v247
        %v319 = vunpack.c.l.b16 %v248
        %v320 = vunpack.c.l.b16 %v249
        %v321 = vunpack.c.l.b16 %v250
        %v322 = vunpack.c.l.b16 %v251
        %v323 = vunpack.c.l.b16 %v252
        %v324 = vunpack.c.l.b16 %v253
        %v325 = vunpack.c.l.b16 %v254
        %v326 = vunpack.c.l.b16 %v255
        %v327 = vunpack.c.l.b16 %v256
        %v328 = vunpack.c.l.b16 %v257
        %v329 = vunpack.c.l.b16 %v258
        %v330 = vunpack.c.l.b16 %v259
        %v331 = vunpack.c.l.b16 %v260
        %v332 = vunpack.c.l.b16 %v261
        %v333 = vunpack.c.l.b16 %v262
        %v334 = vunpack.c.l.b16 %v263
        %v335 = vunpack.c.l.b16 %v264
        %v336 = vunpack.c.l.b16 %v265
        %v337 = vunpack.c.l.b16 %v266
        %v338 = vunpack.c.l.b16 %v267
        %v339 = vunpack.c.l.b16 %v268
        %v340 = vunpack.c.l.b16 %v269
        %v341 = vunpack.c.l.b16 %v270
        %v342 = vunpack.c.l.b16 %v271
        %v343 = vunpack.c.l.b16 %v272
        %v344 = vunpack.c.l.b16 %v273
        %v345 = vunpack.c.l.b16 %v274
        %v346 = vunpack.c.l.b16 %v275
        %v347 = vpack.c.b16 %v316, %v315
        %v348 = vpack.c.b16 %v318, %v317
        %v349 = vpack.c.b16 %v320, %v319
        %v350 = vpack.c.b16 %v322, %v321
        %v351 = vpack.c.b16 %v324, %v323
        %v352 = vpack.c.b16 %v326, %v325
        %v353 = vpack.c.b16 %v328, %v327
        %v354 = vpack.c.b16 %v330, %v329
        %v355 = vpack.c.b16 %v332, %v331
        %v356 = vpack.c.b16 %v334, %v333
        %v357 = vpack.c.b16 %v336, %v335
        %v358 = vpack.c.b16 %v338, %v337
        %v359 = vpack.c.b16 %v340, %v339
        %v360 = vpack.c.b16 %v342, %v341
        %v361 = vpack.c.b16 %v344, %v343
        %v362 = vpack.c.b16 %v346, %v345
        %379 = vmatprep.subr.bf16.mxu0 0
        %380 = vmatpush1.bf16.msra.mxu0 %v354
        %381 = vmatprep.subr.bf16.mxu0 0
        %382 = vmatpush1.bf16.msra.mxu0 %v353
        %383 = vmatprep.subr.bf16.mxu0 0
        %384 = vmatpush1.bf16.msra.mxu0 %v352
        %385 = vmatprep.subr.bf16.mxu0 0
        %386 = vmatpush1.bf16.msra.mxu0 %v351
        %387 = vmatprep.subr.bf16.mxu0 0
        %388 = vmatpush1.bf16.msra.mxu0 %v350
        %389 = vmatprep.subr.bf16.mxu0 0
        %390 = vmatpush1.bf16.msra.mxu0 %v349
        %391 = vmatprep.subr.bf16.mxu0 0
        %392 = vmatpush1.bf16.msra.mxu0 %v348
        %393 = vmatprep.subr.bf16.mxu0 0
        %394 = vmatpush1.bf16.msra.mxu0 %v347
        %395 = vmatprep.subr.bf16.mxu0 0
        %396 = vmatpush2.bf16.msra.mxu0 %v362
        %397 = vmatprep.subr.bf16.mxu0 0
        %398 = vmatpush2.bf16.msra.mxu0 %v361
        %399 = vmatprep.subr.bf16.mxu0 0
        %400 = vmatpush2.bf16.msra.mxu0 %v360
        %401 = vmatprep.subr.bf16.mxu0 0
        %402 = vmatpush2.bf16.msra.mxu0 %v359
        %403 = vmatprep.subr.bf16.mxu0 0
        %404 = vmatpush2.bf16.msra.mxu0 %v358
        %405 = vmatprep.subr.bf16.mxu0 0
        %406 = vmatpush2.bf16.msra.mxu0 %v357
        %407 = vmatprep.subr.bf16.mxu0 0
        %408 = vmatpush2.bf16.msra.mxu0 %v356
        %409 = vmatprep.subr.bf16.mxu0 0
        %410 = vmatpush2.bf16.msra.mxu0 %v355
        %411 = vmatprep.mubr.bf16.mxu0 %v280
        %412 = vmatmul.mubr.bf16.gmra.mxu0 %v279
        %v413 = vpop.f32.mrf.mxu0
        %v414 = vadd.f32 0.0, %v413
        %v415 = vpop.f32.mrf.mxu0
        %v416 = vpop.f32.mrf.mxu0
        %v417 = vpop.f32.mrf.mxu0
        %418 = vdwg.mxu0
        %v419 = vld [vmem:[%s2] sm:$0xff]
        %v420 = vld [vmem:[%s2 + $0x8] sm:$0xff]
        %v421 = vld [vmem:[%s2 + $0x10] sm:$0xff]
        %v422 = vld [vmem:[%s2 + $0x18] sm:$0xff]
        %v423 = vld [vmem:[%s3] sm:$0xff]
        %v424 = vld [vmem:[%s3 + $0x8] sm:$0xff]
        %v425 = vld [vmem:[%s3 + $0x10] sm:$0xff]
        %v426 = vld [vmem:[%s3 + $0x18] sm:$0xff]
        %428 = vset.pattern.permute.xlu0 0
        %429 = vperm.xlu0 %428, %v423
        %v430 = vpop.permute.xlu0 %429
        %433 = vset.pattern.permute.xlu0 0
        %434 = vperm.xlu0 %433, %v424
        %v435 = vpop.permute.xlu0 %434
        %438 = vset.pattern.permute.xlu0 0
        %439 = vperm.xlu0 %438, %v425
        %v440 = vpop.permute.xlu0 %439
        %443 = vset.pattern.permute.xlu0 0
        %444 = vperm.xlu0 %443, %v426
        %v445 = vpop.permute.xlu0 %444
        %vm447 = vcmask 64512
        %v449 = vsel %vm447, %v419, 0
        %v452 = vsel %vm447, %v420, 0
        %v455 = vsel %vm447, %v421, 0
        %v458 = vsel %vm447, %v422, 0
        %460 = vmatprep.subr.mxu0 0.0
        %461 = vmatpush1.msra.mxu0 0.0
        %462 = vmatprep.subr.mxu0 0.0
        %463 = vmatpush1.msra.mxu0 0.0
        %464 = vmatprep.subr.mxu0 0.0
        %465 = vmatpush1.msra.mxu0 0.0
        %466 = vmatprep.subr.mxu0 0.0
        %467 = vmatpush1.msra.mxu0 0.0
        %468 = vmatprep.subr.mxu0 0.0
        %469 = vmatpush1.msra.mxu0 0.0
        %470 = vmatprep.subr.mxu0 0.0
        %471 = vmatpush1.msra.mxu0 0.0
        %472 = vmatprep.subr.mxu0 0.0
        %473 = vmatpush1.msra.mxu0 0.0
        %474 = vmatprep.subr.mxu0 0.0
        %475 = vmatpush1.msra.mxu0 0.0
        %476 = vmatprep.subr.mxu0 0.0
        %477 = vmatpush1.msra.mxu0 0.0
        %478 = vmatprep.subr.mxu0 0.0
        %479 = vmatpush1.msra.mxu0 0.0
        %480 = vmatprep.subr.mxu0 0.0
        %481 = vmatpush1.msra.mxu0 0.0
        %482 = vmatprep.subr.mxu0 0.0
        %483 = vmatpush1.msra.mxu0 0.0
        %484 = vmatprep.subr.mxu0 0.0
        %485 = vmatpush1.msra.mxu0 0.0
        %486 = vmatprep.subr.mxu0 0.0
        %487 = vmatpush1.msra.mxu0 0.0
        %488 = vmatprep.subr.mxu0 0.0
        %489 = vmatpush1.msra.mxu0 0.0
        %490 = vmatprep.subr.mxu0 0.0
        %491 = vmatpush1.msra.mxu0 %v414
        %492 = vmatprep.subr.mxu0 0.0
        %493 = vmatpush2.msra.mxu0 0.0
        %494 = vmatprep.subr.mxu0 0.0
        %495 = vmatpush2.msra.mxu0 0.0
        %496 = vmatprep.subr.mxu0 0.0
        %497 = vmatpush2.msra.mxu0 0.0
        %498 = vmatprep.subr.mxu0 0.0
        %499 = vmatpush2.msra.mxu0 0.0
        %500 = vmatprep.subr.mxu0 0.0
        %501 = vmatpush2.msra.mxu0 0.0
        %502 = vmatprep.subr.mxu0 0.0
        %503 = vmatpush2.msra.mxu0 0.0
        %504 = vmatprep.subr.mxu0 0.0
        %505 = vmatpush2.msra.mxu0 0.0
        %506 = vmatprep.subr.mxu0 0.0
        %507 = vmatpush2.msra.mxu0 0.0
        %508 = vmatprep.subr.mxu0 0.0
        %509 = vmatpush2.msra.mxu0 0.0
        %510 = vmatprep.subr.mxu0 0.0
        %511 = vmatpush2.msra.mxu0 0.0
        %512 = vmatprep.subr.mxu0 0.0
        %513 = vmatpush2.msra.mxu0 0.0
        %514 = vmatprep.subr.mxu0 0.0
        %515 = vmatpush2.msra.mxu0 0.0
        %516 = vmatprep.subr.mxu0 0.0
        %517 = vmatpush2.msra.mxu0 0.0
        %518 = vmatprep.subr.mxu0 0.0
        %519 = vmatpush2.msra.mxu0 0.0
        %520 = vmatprep.subr.mxu0 0.0
        %521 = vmatpush2.msra.mxu0 0.0
        %522 = vmatprep.subr.mxu0 0.0
        %523 = vmatpush2.msra.mxu0 0.0
        %524 = vmatprep.mubr.f32.mxu0 0.0
        %525 = vmatmul.mubr.f32.gmra.mxu0 %v449
        %v526 = vpop.f32.mrf.mxu0
        %v527 = vadd.f32 %v430, %v526
        %v528 = vpop.f32.mrf.mxu0
        %529 = vmatprep.mubr.f32.mxu0 0.0
        %530 = vmatmul.mubr.f32.gmra.mxu0 %v452
        %v531 = vpop.f32.mrf.mxu0
        %v532 = vadd.f32 %v435, %v531
        %v533 = vpop.f32.mrf.mxu0
        %534 = vmatprep.mubr.f32.mxu0 0.0
        %535 = vmatmul.mubr.f32.gmra.mxu0 %v455
        %v536 = vpop.f32.mrf.mxu0
        %v537 = vadd.f32 %v440, %v536
        %v538 = vpop.f32.mrf.mxu0
        %539 = vmatprep.mubr.f32.mxu0 0.0
        %540 = vmatmul.mubr.f32.gmra.mxu0 %v458
        %v541 = vpop.f32.mrf.mxu0
        %v542 = vadd.f32 %v445, %v541
        %v543 = vpop.f32.mrf.mxu0
        %544 = vdwg.mxu0
        %v545 = vmax.f32 %v527, 0.0
        %v546 = vmax.f32 %v532, 0.0
        %v547 = vmax.f32 %v537, 0.0
        %v548 = vmax.f32 %v542, 0.0
        %v549 = vld [vmem:[%s4] sm:$0xff]
        %vm550 = vcmask 261120
        %v552 = vsel %vm550, %v549, 0
        %554 = vmatprep.subr.mxu0 0.0
        %555 = vmatpush1.msra.mxu0 0.0
        %556 = vmatprep.subr.mxu0 0.0
        %557 = vmatpush1.msra.mxu0 0.0
        %558 = vmatprep.subr.mxu0 0.0
        %559 = vmatpush1.msra.mxu0 0.0
        %560 = vmatprep.subr.mxu0 0.0
        %561 = vmatpush1.msra.mxu0 0.0
        %562 = vmatprep.subr.mxu0 0.0
        %563 = vmatpush1.msra.mxu0 0.0
        %564 = vmatprep.subr.mxu0 0.0
        %565 = vmatpush1.msra.mxu0 0.0
        %566 = vmatprep.subr.mxu0 0.0
        %567 = vmatpush1.msra.mxu0 0.0
        %568 = vmatprep.subr.mxu0 0.0
        %569 = vmatpush1.msra.mxu0 0.0
        %570 = vmatprep.subr.mxu0 0.0
        %571 = vmatpush1.msra.mxu0 0.0
        %572 = vmatprep.subr.mxu0 0.0
        %573 = vmatpush1.msra.mxu0 0.0
        %574 = vmatprep.subr.mxu0 0.0
        %575 = vmatpush1.msra.mxu0 0.0
        %576 = vmatprep.subr.mxu0 0.0
        %577 = vmatpush1.msra.mxu0 0.0
        %578 = vmatprep.subr.mxu0 0.0
        %579 = vmatpush1.msra.mxu0 %v548
        %580 = vmatprep.subr.mxu0 0.0
        %581 = vmatpush1.msra.mxu0 %v547
        %582 = vmatprep.subr.mxu0 0.0
        %583 = vmatpush1.msra.mxu0 %v546
        %584 = vmatprep.subr.mxu0 0.0
        %585 = vmatpush1.msra.mxu0 %v545
        %586 = vmatprep.subr.mxu0 0.0
        %587 = vmatpush2.msra.mxu0 0.0
        %588 = vmatprep.subr.mxu0 0.0
        %589 = vmatpush2.msra.mxu0 0.0
        %590 = vmatprep.subr.mxu0 0.0
        %591 = vmatpush2.msra.mxu0 0.0
        %592 = vmatprep.subr.mxu0 0.0
        %593 = vmatpush2.msra.mxu0 0.0
        %594 = vmatprep.subr.mxu0 0.0
        %595 = vmatpush2.msra.mxu0 0.0
        %596 = vmatprep.subr.mxu0 0.0
        %597 = vmatpush2.msra.mxu0 0.0
        %598 = vmatprep.subr.mxu0 0.0
        %599 = vmatpush2.msra.mxu0 0.0
        %600 = vmatprep.subr.mxu0 0.0
        %601 = vmatpush2.msra.mxu0 0.0
        %602 = vmatprep.subr.mxu0 0.0
        %603 = vmatpush2.msra.mxu0 0.0
        %604 = vmatprep.subr.mxu0 0.0
        %605 = vmatpush2.msra.mxu0 0.0
        %606 = vmatprep.subr.mxu0 0.0
        %607 = vmatpush2.msra.mxu0 0.0
        %608 = vmatprep.subr.mxu0 0.0
        %609 = vmatpush2.msra.mxu0 0.0
        %610 = vmatprep.subr.mxu0 0.0
        %611 = vmatpush2.msra.mxu0 0.0
        %612 = vmatprep.subr.mxu0 0.0
        %613 = vmatpush2.msra.mxu0 0.0
        %614 = vmatprep.subr.mxu0 0.0
        %615 = vmatpush2.msra.mxu0 0.0
        %616 = vmatprep.subr.mxu0 0.0
        %617 = vmatpush2.msra.mxu0 0.0
        %618 = vmatprep.mubr.f32.mxu0 0.0
        %619 = vmatmul.mubr.f32.gmra.mxu0 %v552
        %v620 = vpop.f32.mrf.mxu0
        %v621 = vadd.f32 0.0, %v620
        %v622 = vpop.f32.mrf.mxu0
        %623 = vdwg.mxu0
        %624 = vst [vmem:[%s241] sm:$0xff] %v621
        %s625 = sand.u32 %s140, 1
        %s626 = scalar_lea.sflag [#allocation4], %s625
        %s627 = sand.u32 %s140, 1
        %s628 = smul.addr %s627, 8
        %s629 = scalar_lea.vmem [#allocation5], %s628
        // Predicated region
        $region45: #{tpu_custom_call.1} parent=39 // pred_check
          %p630 = pneg %p150
        $region46: #{tpu_custom_call.1} parent=39 // pred_check_branch
          %632 = sbr.rel (%p630) target = $region48
        $region47: #{tpu_custom_call.1} parent=39 // pred_region
          %s634 = ssub.s32 128, 128
          %635 = vsyncadd %s626, %s634
          %s636 = smul.addr %s22, 128
          %s637 = scalar_lea.hbm %s5, %s636
          %s639 = sshll.u32 %s629, 4
          %s640 = int_to_ptr.vmem [resolvable:$true] %s639
          %642 = dma.vmem_to_hbm [thread:$0]  %s640, 128, %s637, %s626
        $region48: #{tpu_custom_call.1} parent=39 // pred_fallthru
          _
      $region40: #{tpu_custom_call.1} parent=5 // pred_fallthru
        _
      %p643 = scmp.le.s32.totalorder 2, %s17
      // Predicated region
      $region49: #{tpu_custom_call.1} parent=5 // pred_check
        %p644 = pneg %p643
      $region50: #{tpu_custom_call.1} parent=5 // pred_check_branch
        %646 = sbr.rel (%p644) target = $region52
      $region51: #{tpu_custom_call.1} parent=5 // pred_region
        %s647 = ssub.s32 %s17, 2
        // Predicated region
        $region53: #{tpu_custom_call.1} parent=51 // pred_check
          %p648 = pneg %p156
        $region54: #{tpu_custom_call.1} parent=51 // pred_check_branch
          %650 = sbr.rel (%p648) target = $region56
        $region55: #{tpu_custom_call.1} parent=51 // pred_region
          %s651 = sand.u32 %s141, 1
          %s652 = scalar_lea.sflag [#allocation4], %s651
          %s653 = sand.u32 %s141, 1
          %s654 = smul.addr %s653, 8
          %s655 = scalar_lea.vmem [#allocation5], %s654
          %656 = dma.done %s652, 128
        $region56: #{tpu_custom_call.1} parent=51 // pred_fallthru
          _
      $region52: #{tpu_custom_call.1} parent=5 // pred_fallthru
        _
    $region6: #{tpu_custom_call.1} parent=1 // loop_footer
      %s21 = sadd.s32 1, %s17
    $region7: #{tpu_custom_call.1} parent=1 // loop_footer_branch
      %16 = sbr.rel target = $region3
    $region8: #{tpu_custom_call.1} parent=1 // loop_exit
      _
    %657 = vsyncpa [#allocation3], 1
    %s658 = scalar_lea.sflag [#allocation3], 1
    %659 = vsyncpa %s658, 1
    %660 = vsyncpa [#allocation4], 1
    %s661 = scalar_lea.sflag [#allocation4], 1
    %662 = vsyncpa %s661, 1

</llo_original>
